<compile_context>
chip_gen: v7x
topology: tpu7x:2x2x1
jax: 0.10.0
libtpu: 0.0.40
codegen_flags: <defaults>
</compile_context>

<pallas_src>
import jax
import jax.numpy as jnp
import numpy as np
from jax.experimental import pallas as pl
from jax.experimental.pallas import tpu as pltpu

LANE = 128      # vreg lane width: last block dims must be multiples of this or the full dim
SUBLANE = 8     # vreg sublane height: row-tile sizes must be multiples of 8 or the full dim
_TINY_FLOPS = 1 << 22   # below ~4 MFLOP, pallas_call/grid overhead dominates -> use XLA


def _round_up(x, m):
    return (x + m - 1) // m * m


def _vmem_budget_and_limit():
    """Generation-aware VMEM numbers: (block-picking budget, vmem_limit_bytes)."""
    try:
        phys = pltpu.get_tpu_info().vmem_capacity_bytes
    except Exception:
        phys = 64 * 1024 * 1024                      # conservative: v7x per-core VMEM
    limit = min(int(phys * 3 // 4), 100 * 1024 * 1024)  # ~96 MiB on v5e/v6e, 48 MiB on v7x
    budget = limit - 8 * 1024 * 1024                 # headroom for compiler-internal scratch
    return budget, limit


# ---------------------------------------------------------------------------
# Kernels
# ---------------------------------------------------------------------------

def _linear_zeros_kernel(x_ref, wt_ref, b_ref, o_ref):
    """One (block_m, N) output tile: o = x @ W' + b' (exp-scale already folded into W', b')."""
    x = x_ref[...].astype(wt_ref.dtype)                                   # cast in-kernel (no extra HBM pass)
    y = jnp.dot(x, wt_ref[...], preferred_element_type=jnp.float32)       # f32 accumulation on the MXU
    o_ref[...] = (y + b_ref[...]).astype(o_ref.dtype)                     # f32 epilogue, cast at store


def _linear_zeros_kernel_ktiled(x_ref, wt_ref, b_ref, o_ref, acc_ref):
    """K-tiled fallback: f32 accumulator across the (last, 'arbitrary') K grid axis."""
    kk = pl.program_id(1)

    @pl.when(kk == 0)
    def _():
        acc_ref[...] = jnp.zeros_like(acc_ref)

    x = x_ref[...].astype(wt_ref.dtype)
    acc_ref[...] += jnp.dot(x, wt_ref[...], preferred_element_type=jnp.float32)

    @pl.when(kk == pl.num_programs(1) - 1)
    def _():
        o_ref[...] = (acc_ref[...] + b_ref[...]).astype(o_ref.dtype)


# ---------------------------------------------------------------------------
# Tiling heuristics
# ---------------------------------------------------------------------------

def _pick_block_m_resident(m, k, n, x_itemsize, w_itemsize, out_itemsize, budget):
    """Largest row tile (multiple of 8, capped at 2048) such that the resident weight plus
    double-buffered x/out streams fit the VMEM budget, and the M grid has >= 2 tiles."""
    resident = k * n * w_itemsize + n * 4                       # W' + b' live across the grid
    per_row = 2 * (k * x_itemsize + n * out_itemsize)           # double-buffered x-in / out
    avail = budget - resident
    tm = avail // max(per_row, 1) if avail > 0 else SUBLANE
    tm = min(tm, 2048, _round_up(m, SUBLANE))
    if m > SUBLANE:                                             # >=2 row tiles -> both v7x TCs busy
        tm = min(tm, _round_up(pl.cdiv(m, 2), SUBLANE))
    return max(SUBLANE, (tm // SUBLANE) * SUBLANE)


def _pick_tk(k, n, w_itemsize, budget):
    """Lane-aligned K tile for the K-tiled fallback (double-buffered W' K-blocks)."""
    tk = ((budget // 2) // max(2 * n * w_itemsize, 1)) // LANE * LANE
    tk = max(LANE, min(tk, 2048, _round_up(k, LANE)))
    # TODO(synk): if even a single (128, N) weight block cannot fit VMEM (enormous N),
    # an additional N-tiled grid axis is needed; not implemented here.
    return tk


def _pick_block_m_ktiled(m, tk, n, x_itemsize, w_itemsize, out_itemsize, budget):
    resident = 2 * tk * n * w_itemsize + n * 4                      # double-buffered W' blocks + b'
    per_row = 2 * tk * x_itemsize + 2 * n * out_itemsize + n * 4    # x stream, out, f32 acc
    avail = budget - resident
    tm = avail // max(per_row, 1) if avail > 0 else SUBLANE
    tm = min(tm, 1024, _round_up(m, SUBLANE))
    if m > SUBLANE:
        tm = min(tm, _round_up(pl.cdiv(m, 2), SUBLANE))
    return max(SUBLANE, (tm // SUBLANE) * SUBLANE)


# ---------------------------------------------------------------------------
# Parameter prep (call once at init, NOT per forward)
# ---------------------------------------------------------------------------

def prepare_linear_zeros_params(weight, bias, logs, logscale_factor=3.0,
                                compute_dtype=jnp.bfloat16, *,
                                force_mode=None, tk_override=None):
    """Fold exp(logs*logscale_factor) into weight/bias, transpose weight to (K, N), and
    decide between the VMEM-resident fast path and the K-tiled fallback for huge weights."""
    out_channels, in_channels = weight.shape
    scale = jnp.exp(logs.astype(jnp.float32) * float(logscale_factor))          # (N,)
    wt = weight.astype(jnp.float32).T * scale[None, :]                          # (K, N), scale folded
    b = (bias.astype(jnp.float32) * scale).reshape(1, out_channels)             # (1, N), scale folded

    w_itemsize = np.dtype(compute_dtype).itemsize
    budget, _ = _vmem_budget_and_limit()
    resident = in_channels * out_channels * w_itemsize + out_channels * 4
    stream_min = 256 * 2 * (in_channels + out_channels) * 4     # room for >=256-row f32 streams
    mode = force_mode or ("resident" if resident + stream_min <= budget else "ktiled")

    params = {"bias": b, "in_channels": in_channels, "out_channels": out_channels, "mode": mode}
    if mode == "resident":
        params["wt"] = wt.astype(compute_dtype)                 # (K, N): no padding anywhere
        return params

    # K-tiled fallback: lane-aligned K tile, W' rows zero-padded to a whole number of tiles
    # (zero rows guarantee the padded K region contributes nothing).
    tk = tk_override if tk_override is not None else _pick_tk(in_channels, out_channels,
                                                              w_itemsize, budget)
    gk = pl.cdiv(in_channels, tk)
    tk = _round_up(pl.cdiv(in_channels, gk), LANE)              # minimize padding (< 128*gk cols)
    kp = gk * tk
    wt_pad = (jnp.zeros((kp, out_channels), compute_dtype)
              .at[:in_channels].set(wt.astype(compute_dtype)))
    params.update(wt=wt_pad, tk=tk)
    return params


# ---------------------------------------------------------------------------
# Apply
# ---------------------------------------------------------------------------

def linear_zeros_apply(x, params, *, block_m=None, out_dtype=None):
    """Apply prepared LinearZeros params: x (..., in_channels) -> (..., out_channels)."""
    wt, b = params["wt"], params["bias"]
    k, n = params["in_channels"], params["out_channels"]
    assert x.shape[-1] == k, f"expected last dim {k}, got {x.shape[-1]}"
    lead = x.shape[:-1]
    x2d = x.reshape(-1, k)
    m = x2d.shape[0]
    out_dtype = x2d.dtype if out_dtype is None else np.dtype(out_dtype)
    budget, vmem_limit = _vmem_budget_and_limit()

    def _clamp_bm(bm):
        if m < SUBLANE:
            return m                                            # block dim == full dim is legal
        return max(SUBLANE, (min(bm, _round_up(m, SUBLANE)) // SUBLANE) * SUBLANE)

    if params["mode"] == "resident":
        if block_m is None:
            block_m = _pick_block_m_resident(m, k, n, x2d.dtype.itemsize,
                                             wt.dtype.itemsize, out_dtype.itemsize, budget)
        block_m = _clamp_bm(block_m)
        gm = pl.cdiv(m, block_m)
        cost = pl.CostEstimate(
            flops=2 * m * k * n, transcendentals=0,
            bytes_accessed=(x2d.size * x2d.dtype.itemsize + wt.size * wt.dtype.itemsize
                            + m * n * out_dtype.itemsize))
        out = pl.pallas_call(
            _linear_zeros_kernel,
            out_shape=jax.ShapeDtypeStruct((m, n), out_dtype),
            grid=(gm,),
            in_specs=[
                pl.BlockSpec((block_m, k), lambda i: (i, 0)),   # x: streamed, unpadded, pipelined
                pl.BlockSpec((k, n), lambda i: (0, 0)),         # W': VMEM-resident across the grid
                pl.BlockSpec((1, n), lambda i: (0, 0)),         # b': VMEM-resident across the grid
            ],
            out_specs=pl.BlockSpec((block_m, n), lambda i: (i, 0)),
            compiler_params=pltpu.CompilerParams(
                dimension_semantics=("parallel",),              # shard row tiles across v7x's 2 TCs
                vmem_limit_bytes=vmem_limit),
            cost_estimate=cost,
        )(x2d, wt, b)
        return out.reshape(*lead, n)

    # ---- K-tiled fallback: weight too large to stay VMEM-resident ----
    kp = wt.shape[0]
    tk = params["tk"]
    if kp != k:
        # Rare large-K path only: pad K so every K block is fully in-bounds
        # (padding is < tk columns, negligible relative to the large K).
        x2d = jnp.zeros((m, kp), x2d.dtype).at[:, :k].set(x2d)
    gk = kp // tk
    if block_m is None:
        block_m = _pick_block_m_ktiled(m, tk, n, x2d.dtype.itemsize,
                                       wt.dtype.itemsize, out_dtype.itemsize, budget)
    block_m = _clamp_bm(block_m)
    gm = pl.cdiv(m, block_m)
    cost = pl.CostEstimate(
        flops=2 * m * kp * n, transcendentals=0,
        bytes_accessed=(x2d.size * x2d.dtype.itemsize + wt.size * wt.dtype.itemsize
                        + m * n * out_dtype.itemsize))
    out = pl.pallas_call(
        _linear_zeros_kernel_ktiled,
        out_shape=jax.ShapeDtypeStruct((m, n), out_dtype),
        grid=(gm, gk),                                          # reduction (K) axis last
        in_specs=[
            pl.BlockSpec((block_m, tk), lambda i, kk: (i, kk)),
            pl.BlockSpec((tk, n), lambda i, kk: (kk, 0)),
            pl.BlockSpec((1, n), lambda i, kk: (0, 0)),
        ],
        out_specs=pl.BlockSpec((block_m, n), lambda i, kk: (i, 0)),
        scratch_shapes=[pltpu.VMEM((block_m, n), jnp.float32)],
        compiler_params=pltpu.CompilerParams(
            dimension_semantics=("parallel", "arbitrary"),
            vmem_limit_bytes=vmem_limit),
        cost_estimate=cost,
    )(x2d, wt, b)
    return out.reshape(*lead, n)


# ---------------------------------------------------------------------------
# Convenience wrapper (caches prep per parameter set)
# ---------------------------------------------------------------------------

_PARAMS_CACHE = {}


def linear_zeros(x, weight, bias, logs, logscale_factor=3.0, *,
                 use_bf16=True, block_m=None, force_pallas=False):
    """Full LinearZeros.forward. Prefer prepare_linear_zeros_params() + linear_zeros_apply()
    in training/inference loops; this wrapper caches the one-time prep per parameter set."""
    out_channels, in_channels = weight.shape
    m = x.size // in_channels
    compute_dtype = jnp.bfloat16 if use_bf16 else jnp.float32
    if not force_pallas and 2 * m * in_channels * out_channels < _TINY_FLOPS:
        # Tiny problem: XLA's fused matmul+epilogue beats a kernel dispatch. Same scale
        # folding + compute dtype as the Pallas path so results agree across the threshold.
        scale = jnp.exp(logs.astype(jnp.float32) * float(logscale_factor))
        wt = (weight.astype(jnp.float32).T * scale[None, :]).astype(compute_dtype)
        b = bias.astype(jnp.float32) * scale
        y = jnp.dot(x.astype(compute_dtype), wt, preferred_element_type=jnp.float32) + b
        return y.astype(x.dtype)

    key = (id(weight), id(bias), id(logs), float(logscale_factor), np.dtype(compute_dtype).str)
    hit = _PARAMS_CACHE.get(key)
    if hit is not None and hit[0] is weight and hit[1] is bias and hit[2] is logs:
        params = hit[3]
    else:
        params = prepare_linear_zeros_params(weight, bias, logs, logscale_factor, compute_dtype)
        if len(_PARAMS_CACHE) > 64:
            _PARAMS_CACHE.clear()
        _PARAMS_CACHE[key] = (weight, bias, logs, params)       # pin arrays so ids stay valid
    return linear_zeros_apply(x, params, block_m=block_m)


# ---------------------------------------------------------------------------
# Demo / checks
# ---------------------------------------------------------------------------

if __name__ == "__main__":
    key = jax.random.PRNGKey(0)
    k_x, k_w, k_b, k_l, k_x2, k_w2, k_b2, k_l2 = jax.random.split(key, 8)

    # Small shapes consistent with the module: x (batch, seq, in_ch) -> (..., out_ch).
    batch, seq, cin, cout = 2, 128, 32, 16
    x = jax.random.normal(k_x, (batch, seq, cin), dtype=jnp.float32)
    # Module __init__ zeros weight/bias/logs; use small non-zero values so the math is exercised.
    weight = 0.05 * jax.random.normal(k_w, (cout, cin), dtype=jnp.float32)
    bias = 0.05 * jax.random.normal(k_b, (cout,), dtype=jnp.float32)
    logs = 0.05 * jax.random.normal(k_l, (cout,), dtype=jnp.float32)

    # Pure-JAX reference.
    ref = (x @ weight.T + bias) * jnp.exp(logs * 3.0)

    # 1) Resident fast path, f32 compute: tight semantic check (grid of 2 row tiles).
    p_f32 = prepare_linear_zeros_params(weight, bias, logs, 3.0, compute_dtype=jnp.float32)
    assert p_f32["mode"] == "resident"
    out_f32 = jax.block_until_ready(linear_zeros_apply(x, p_f32, block_m=128))
    assert out_f32.shape == ref.shape
    assert jnp.allclose(out_f32, ref, atol=1e-4, rtol=1e-4)

    # 2) Resident fast path, bf16 MXU operands (production default), auto block_m.
    p_bf16 = prepare_linear_zeros_params(weight, bias, logs, 3.0, compute_dtype=jnp.bfloat16)
    out_bf16 = jax.block_until_ready(linear_zeros_apply(x, p_bf16))
    assert jnp.allclose(out_bf16, ref, atol=2e-2, rtol=2e-2)

    # 3) Ragged row count (m = 200, not a multiple of the tile): masked boundary stores.
    x_rag = x[:, :100]
    out_rag = jax.block_until_ready(linear_zeros_apply(x_rag, p_f32))
    assert out_rag.shape == (batch, 100, cout)
    assert jnp.allclose(out_rag, ref[:, :100], atol=1e-4, rtol=1e-4)

    # 4) K-tiled fallback path (forced small so the demo exercises 2 accumulating K blocks).
    cin2, cout2 = 200, 24
    x2 = jax.random.normal(k_x2, (2, 64, cin2), dtype=jnp.float32)
    w2 = 0.02 * jax.random.normal(k_w2, (cout2, cin2), dtype=jnp.float32)
    b2 = 0.02 * jax.random.normal(k_b2, (cout2,), dtype=jnp.float32)
    l2 = 0.02 * jax.random.normal(k_l2, (cout2,), dtype=jnp.float32)
    ref2 = (x2 @ w2.T + b2) * jnp.exp(l2 * 3.0)
    p_kt = prepare_linear_zeros_params(w2, b2, l2, 3.0, compute_dtype=jnp.float32,
                                       force_mode="ktiled", tk_override=128)
    assert p_kt["mode"] == "ktiled"
    out_kt = jax.block_until_ready(linear_zeros_apply(x2, p_kt))
    assert out_kt.shape == ref2.shape
    assert jnp.allclose(out_kt, ref2, atol=1e-3, rtol=1e-3)

    # 5) Convenience wrapper: tiny slice routes to the fused-XLA fallback (same folding/dtype).
    out_tiny = jax.block_until_ready(linear_zeros(x[:, :8], weight, bias, logs))
    assert jnp.allclose(out_tiny, ref[:, :8], atol=2e-2, rtol=2e-2)

    print("KERNEL_OK")
</pallas_src>

<mosaic_0001>
module attributes {stable_mosaic.version = 11 : i64} {
  func.func @_linear_zeros_kernel(%arg0: i32, %arg1: memref<128x32xf32, #tpu.memory_space<vmem>>, %arg2: memref<32x16xf32, #tpu.memory_space<vmem>>, %arg3: memref<1x16xf32, #tpu.memory_space<vmem>>, %arg4: memref<128x16xf32, #tpu.memory_space<vmem>>) attributes {dimension_semantics = [#tpu.dimension_semantics<parallel>], iteration_bounds = array<i64: 2>, scalar_prefetch = 0 : i64, scratch_operands = 0 : i64, tpu.core_type = #tpu.core_type<tc>, window_params = [{transform_indices = @transform_0, window_bounds = array<i64: 128, 32>}, {pipeline_mode = #tpu.pipeline_mode<synchronous>, transform_indices = @transform_1, window_bounds = array<i64: 32, 16>}, {pipeline_mode = #tpu.pipeline_mode<synchronous>, transform_indices = @transform_2, window_bounds = array<i64: 1, 16>}, {transform_indices = @transform_3, window_bounds = array<i64: 128, 16>}]} {
    %c0 = arith.constant 0 : index
    %c0_0 = arith.constant 0 : index
    %0 = vector.load %arg1[%c0, %c0_0] : memref<128x32xf32, #tpu.memory_space<vmem>>, vector<128x32xf32>
    %c0_1 = arith.constant 0 : index
    %c0_2 = arith.constant 0 : index
    %1 = vector.load %arg2[%c0_1, %c0_2] : memref<32x16xf32, #tpu.memory_space<vmem>>, vector<32x16xf32>
    %cst = arith.constant dense<0.000000e+00> : vector<128x16xf32>
    %2 = tpu.matmul %0, %1, %cst {dimension_numbers = #tpu.dot_dimension_numbers<[1], [0], [0], [1], [0, 0, 1, 1], [], []>} : vector<128x32xf32>, vector<32x16xf32>, vector<128x16xf32> -> vector<128x16xf32>
    %c0_3 = arith.constant 0 : index
    %c0_4 = arith.constant 0 : index
    %3 = vector.load %arg3[%c0_3, %c0_4] : memref<1x16xf32, #tpu.memory_space<vmem>>, vector<1x16xf32>
    %4 = vector.broadcast %3 : vector<1x16xf32> to vector<128x16xf32>
    %5 = arith.addf %2, %4 : vector<128x16xf32>
    %c0_5 = arith.constant 0 : index
    %c0_6 = arith.constant 0 : index
    %6 = vector.load %arg4[%c0_5, %c0_6] : memref<128x16xf32, #tpu.memory_space<vmem>>, vector<128x16xf32>
    tpu.vector_store %arg4[%c0_5, %c0_6], %5 {strides = array<i32>} : memref<128x16xf32, #tpu.memory_space<vmem>>, vector<128x16xf32>,
    return
  }
  func.func @transform_0(%arg0: i32) -> (i32, i32) {
    %c0_i32 = arith.constant 0 : i32
    %c0_i32_0 = arith.constant 0 : i32
    return %arg0, %c0_i32 : i32, i32
  }
  func.func @transform_1(%arg0: i32) -> (i32, i32) {
    %c0_i32 = arith.constant 0 : i32
    %c0_i32_0 = arith.constant 0 : i32
    %c0_i32_1 = arith.constant 0 : i32
    return %c0_i32, %c0_i32_0 : i32, i32
  }
  func.func @transform_2(%arg0: i32) -> (i32, i32) {
    %c0_i32 = arith.constant 0 : i32
    %c0_i32_0 = arith.constant 0 : i32
    %c0_i32_1 = arith.constant 0 : i32
    return %c0_i32, %c0_i32_0 : i32, i32
  }
  func.func @transform_3(%arg0: i32) -> (i32, i32) {
    %c0_i32 = arith.constant 0 : i32
    %c0_i32_0 = arith.constant 0 : i32
    return %arg0, %c0_i32 : i32, i32
  }
}

</mosaic_0001>

<llo_original>
// kernel: tpu_custom_call.1
$region0: #{tpu_custom_call.1}
  #allocation0 [shape = 'u32[]', space=smem, size = 0x4, offset = 0x4, fixed_abs, tag = 'smem constant byte address 0x4 - core index']
  #allocation1 [shape = 'u32[144,128]{1,0:T(1,128)}', space=vmem, size = 0x12000, scoped, tag = 'internal scratch']
  %s0 = inlined_call_operand.vmem [shape: f32[256,32], index: 0, kind: input, shape index: {}]
  %s1 = inlined_call_operand.vmem [shape: f32[32,16], index: 1, kind: input, shape index: {}]
  %s2 = inlined_call_operand.vmem [shape: f32[1,16], index: 2, kind: input, shape index: {}]
  %s3 = inlined_call_operand.vmem [shape: f32[256,16], index: 3, kind: output, shape index: {}]
  %s4 = sld [smem:[#allocation0]]
  $region45: #{tpu_custom_call.1} parent=0
    _
  %s6 = ssub.s32 1, %s4
  %s7 = scalar_select 0, %s6, %s4
  loop: start=0, step=1, limit=4
  $region2: #{tpu_custom_call.1} parent=0 // loop_pre_header
    _
  $region3: #{tpu_custom_call.1} parent=0 // loop_header
    %s9 = sphi 0, %s13
    %p10 = scmp.ge.s32.totalorder %s9, 4
    %s19 = sphi 0, %s21
    %s22 = sphi 0, %s19
    %s23 = sphi 0, %s22
    %s39 = sphi 0, %s23
    %s43 = sphi 0, %s43
    %s45 = sphi 0, %s43
    %s46 = sphi 0, %s45
    %s60 = sphi 0, %s46
    %s64 = sphi 0, %s64
    %s66 = sphi 0, %s64
    %s67 = sphi 0, %s66
    %s81 = sphi 0, %s67
    %s87 = sphi 0, %s89
    %s90 = sphi 0, %s87
    %s91 = sphi 0, %s90
    %s107 = sphi 0, %s91
  $region4: #{tpu_custom_call.1} parent=0 // loop_header_branch
    %12 = sbr.rel (%p10) target = $region8
  $region5: #{tpu_custom_call.1} parent=0 // loop_body
    %s14 = ssub.s32 %s9, 1
    %s15 = ssub.s32 %s9, 2
    %s16 = sadd.s32 %s9, 1
    %s17 = ssub.s32 %s9, %s16
    %p18 = scmp.eq.s32.totalorder %s17, 0
    %s20 = sadd.s32 %s19, 1
    %s21 = scalar_select %p18, %s19, %s20
    %p24 = pneg %p18
    %p25 = scmp.eq.s32.totalorder %s9, 1
    %p26 = por %p24, %p25
    %p27 = scmp.ne.s32.totalorder %s19, %s22
    %p28 = scmp.eq.s32.totalorder %s9, 0
    %p29 = por %p27, %p28
    %p30 = scmp.ne.s32.totalorder %s19, %s22
    %p31 = scmp.eq.s32.totalorder %s14, 1
    %p32 = por %p30, %p31
    %p33 = scmp.ne.s32.totalorder %s22, %s23
    %p34 = scmp.eq.s32.totalorder %s14, 0
    %p35 = por %p33, %p34
    %p36 = scmp.ne.s32.totalorder %s22, %s23
    %p37 = scmp.eq.s32.totalorder %s15, 1
    %p38 = por %p36, %p37
    %p40 = scmp.ne.s32.totalorder %s23, %s39
    %p41 = scmp.eq.s32.totalorder %s15, 0
    %p42 = por %p40, %p41
    %s44 = sadd.s32 %s43, 1
    %p47 = scmp.eq.s32.totalorder %s9, 1
    %p48 = scmp.ne.s32.totalorder %s43, %s45
    %p49 = scmp.eq.s32.totalorder %s9, 0
    %p50 = por %p48, %p49
    %p51 = scmp.ne.s32.totalorder %s43, %s45
    %p52 = scmp.eq.s32.totalorder %s14, 1
    %p53 = por %p51, %p52
    %p54 = scmp.ne.s32.totalorder %s45, %s46
    %p55 = scmp.eq.s32.totalorder %s14, 0
    %p56 = por %p54, %p55
    %p57 = scmp.ne.s32.totalorder %s45, %s46
    %p58 = scmp.eq.s32.totalorder %s15, 1
    %p59 = por %p57, %p58
    %p61 = scmp.ne.s32.totalorder %s46, %s60
    %p62 = scmp.eq.s32.totalorder %s15, 0
    %p63 = por %p61, %p62
    %s65 = sadd.s32 %s64, 1
    %p68 = scmp.eq.s32.totalorder %s9, 1
    %p69 = scmp.ne.s32.totalorder %s64, %s66
    %p70 = scmp.eq.s32.totalorder %s9, 0
    %p71 = por %p69, %p70
    %p72 = scmp.ne.s32.totalorder %s64, %s66
    %p73 = scmp.eq.s32.totalorder %s14, 1
    %p74 = por %p72, %p73
    %p75 = scmp.ne.s32.totalorder %s66, %s67
    %p76 = scmp.eq.s32.totalorder %s14, 0
    %p77 = por %p75, %p76
    %p78 = scmp.ne.s32.totalorder %s66, %s67
    %p79 = scmp.eq.s32.totalorder %s15, 1
    %p80 = por %p78, %p79
    %p82 = scmp.ne.s32.totalorder %s67, %s81
    %p83 = scmp.eq.s32.totalorder %s15, 0
    %p84 = por %p82, %p83
    %s85 = ssub.s32 %s9, %s16
    %p86 = scmp.eq.s32.totalorder %s85, 0
    %s88 = sadd.s32 %s87, 1
    %s89 = scalar_select %p86, %s87, %s88
    %p92 = pneg %p86
    %p93 = scmp.eq.s32.totalorder %s9, 1
    %p94 = por %p92, %p93
    %p95 = scmp.ne.s32.totalorder %s87, %s90
    %p96 = scmp.eq.s32.totalorder %s9, 0
    %p97 = por %p95, %p96
    %p98 = scmp.ne.s32.totalorder %s87, %s90
    %p99 = scmp.eq.s32.totalorder %s14, 1
    %p100 = por %p98, %p99
    %p101 = scmp.ne.s32.totalorder %s90, %s91
    %p102 = scmp.eq.s32.totalorder %s14, 0
    %p103 = por %p101, %p102
    %p104 = scmp.ne.s32.totalorder %s90, %s91
    %p105 = scmp.eq.s32.totalorder %s15, 1
    %p106 = por %p104, %p105
    %p108 = scmp.ne.s32.totalorder %s91, %s107
    %p109 = scmp.eq.s32.totalorder %s15, 0
    %p110 = por %p108, %p109
    %p111 = scmp.le.s32.totalorder 1, %s9
    %p112 = scmp.lt.s32.totalorder %s9, 3
    %p113 = pnand %p111, %p112
    %p114 = pneg %p113
    // Predicated region
    $region9: #{tpu_custom_call.1} parent=5 // pred_check
      _
    $region10: #{tpu_custom_call.1} parent=5 // pred_check_branch
      %116 = sbr.rel (%p113) target = $region12
    $region11: #{tpu_custom_call.1} parent=5 // pred_region
      %s117 = ssub.s32 %s9, 1
      // Predicated region
      $region13: #{tpu_custom_call.1} parent=11 // pred_check
        %p118 = pneg %p56
      $region14: #{tpu_custom_call.1} parent=11 // pred_check_branch
        %120 = sbr.rel (%p118) target = $region16
      $region15: #{tpu_custom_call.1} parent=11 // pred_region
        _
      $region16: #{tpu_custom_call.1} parent=11 // pred_fallthru
        _
      // Predicated region
      $region17: #{tpu_custom_call.1} parent=11 // pred_check
        %p121 = pneg %p77
      $region18: #{tpu_custom_call.1} parent=11 // pred_check_branch
        %123 = sbr.rel (%p121) target = $region20
      $region19: #{tpu_custom_call.1} parent=11 // pred_region
        _
      $region20: #{tpu_custom_call.1} parent=11 // pred_fallthru
        _
    $region12: #{tpu_custom_call.1} parent=5 // pred_fallthru
      _
    %p124 = scmp.lt.s32.totalorder %s9, 2
    // Predicated region
    $region21: #{tpu_custom_call.1} parent=5 // pred_check
      %p125 = pneg %p124
    $region22: #{tpu_custom_call.1} parent=5 // pred_check_branch
      %127 = sbr.rel (%p125) target = $region24
    $region23: #{tpu_custom_call.1} parent=5 // pred_region
      // Predicated region
      $region25: #{tpu_custom_call.1} parent=23 // pred_check
        %p128 = pneg %p29
      $region26: #{tpu_custom_call.1} parent=23 // pred_check_branch
        %130 = sbr.rel (%p128) target = $region28
      $region27: #{tpu_custom_call.1} parent=23 // pred_region
        %s131 = smul.u32 16, %s9
        %p132 = scmp.lt.s32.totalorder %s131, 31
        %s133 = scalar_select %p132, %s131, 31
        %s134 = smul.addr %s133, 8
        %s135 = scalar_lea.vmem %s0, %s134
        %s136 = smul.u32 16, %s9
      $region28: #{tpu_custom_call.1} parent=23 // pred_fallthru
        _
    $region24: #{tpu_custom_call.1} parent=5 // pred_fallthru
      _
    %p137 = scmp.le.s32.totalorder 1, %s9
    %p138 = scmp.lt.s32.totalorder %s9, 3
    %p139 = pnand %p137, %p138
    %p140 = pneg %p139
    // Predicated region
    $region29: #{tpu_custom_call.1} parent=5 // pred_check
      _
    $region30: #{tpu_custom_call.1} parent=5 // pred_check_branch
      %142 = sbr.rel (%p139) target = $region32
    $region31: #{tpu_custom_call.1} parent=5 // pred_region
      %s143 = ssub.s32 %s9, 1
      %s144 = smul.u32 16, %s14
      %p145 = scmp.lt.s32.totalorder %s144, 31
      %s146 = scalar_select %p145, %s144, 31
      %s147 = smul.addr %s146, 8
      %s148 = scalar_lea.vmem %s0, %s147
      %p149 = pneg %p35
      %p150 = pneg %p32
      %p151 = pneg %p56
      %p152 = pneg %p53
      %p153 = pneg %p77
      %p154 = pneg %p74
      %p155 = pneg %p103
      %p156 = pneg %p100
      %s157 = smul.u32 16, %s14
      %p158 = scmp.lt.s32.totalorder %s157, 31
      %s159 = scalar_select %p158, %s157, 31
      %s160 = smul.addr %s159, 8
      %s161 = scalar_lea.vmem %s3, %s160
      %s162 = smul.u32 16, %s14
      %p163 = scmp.lt.s32.totalorder %s162, 31
      %s164 = scalar_select %p163, %s162, 31
      %s165 = smul.addr %s164, 8
      %s166 = scalar_lea.vmem %s0, %s165
      %s167 = smul.u32 16, %s14
      %s168 = smul.u32 16, %s14
      %p169 = scmp.lt.s32.totalorder %s168, 31
      %s170 = scalar_select %p169, %s168, 31
      %s171 = smul.addr %s170, 8
      %s172 = scalar_lea.vmem %s3, %s171
      %s173 = smul.u32 16, %s14
      %v174 = vld [vmem:[%s166] sm:$0xff]
      %v175 = vld [vmem:[%s166 + $0x8] sm:$0xff]
      %v176 = vld [vmem:[%s166 + $0x10] sm:$0xff]
      %v177 = vld [vmem:[%s166 + $0x18] sm:$0xff]
      %v178 = vld [vmem:[%s166 + $0x20] sm:$0xff]
      %v179 = vld [vmem:[%s166 + $0x28] sm:$0xff]
      %v180 = vld [vmem:[%s166 + $0x30] sm:$0xff]
      %v181 = vld [vmem:[%s166 + $0x38] sm:$0xff]
      %v182 = vld [vmem:[%s166 + $0x40] sm:$0xff]
      %v183 = vld [vmem:[%s166 + $0x48] sm:$0xff]
      %v184 = vld [vmem:[%s166 + $0x50] sm:$0xff]
      %v185 = vld [vmem:[%s166 + $0x58] sm:$0xff]
      %v186 = vld [vmem:[%s166 + $0x60] sm:$0xff]
      %v187 = vld [vmem:[%s166 + $0x68] sm:$0xff]
      %v188 = vld [vmem:[%s166 + $0x70] sm:$0xff]
      %v189 = vld [vmem:[%s166 + $0x78] sm:$0xff]
      %v190 = vld [vmem:[%s1] sm:$0xff]
      %v191 = vld [vmem:[%s1 + $0x8] sm:$0xff]
      %v192 = vld [vmem:[%s1 + $0x10] sm:$0xff]
      %v193 = vld [vmem:[%s1 + $0x18] sm:$0xff]
      %v194 = vld [vmem:[%s2] sm:$0x1]
      %v196 = vlaneseq
      %v197 = vshrl.u32 %v196, 7
      %v198 = vsub.s32 0, %v197
      %v199 = vrot.slane %v194, %v198
      %vm201 = vcmask 261120
      %v203 = vsel %vm201, %v174, 0
      %v206 = vsel %vm201, %v175, 0
      %v209 = vsel %vm201, %v176, 0
      %v212 = vsel %vm201, %v177, 0
      %v215 = vsel %vm201, %v178, 0
      %v218 = vsel %vm201, %v179, 0
      %v221 = vsel %vm201, %v180, 0
      %v224 = vsel %vm201, %v181, 0
      %v227 = vsel %vm201, %v182, 0
      %v230 = vsel %vm201, %v183, 0
      %v233 = vsel %vm201, %v184, 0
      %v236 = vsel %vm201, %v185, 0
      %v239 = vsel %vm201, %v186, 0
      %v242 = vsel %vm201, %v187, 0
      %v245 = vsel %vm201, %v188, 0
      %v248 = vsel %vm201, %v189, 0
      %250 = vmatprep.subr.mxu0 0.0
      %251 = vmatpush1.msra.mxu0 %v190
      %252 = vmatprep.subr.mxu0 0.0
      %253 = vmatpush1.msra.mxu0 %v191
      %254 = vmatprep.subr.mxu0 0.0
      %255 = vmatpush1.msra.mxu0 %v192
      %256 = vmatprep.subr.mxu0 0.0
      %257 = vmatpush1.msra.mxu0 %v193
      %258 = vmatprep.subr.mxu0 0.0
      %259 = vmatpush1.msra.mxu0 0.0
      %260 = vmatprep.subr.mxu0 0.0
      %261 = vmatpush1.msra.mxu0 0.0
      %262 = vmatprep.subr.mxu0 0.0
      %263 = vmatpush1.msra.mxu0 0.0
      %264 = vmatprep.subr.mxu0 0.0
      %265 = vmatpush1.msra.mxu0 0.0
      %266 = vmatprep.subr.mxu0 0.0
      %267 = vmatpush1.msra.mxu0 0.0
      %268 = vmatprep.subr.mxu0 0.0
      %269 = vmatpush1.msra.mxu0 0.0
      %270 = vmatprep.subr.mxu0 0.0
      %271 = vmatpush1.msra.mxu0 0.0
      %272 = vmatprep.subr.mxu0 0.0
      %273 = vmatpush1.msra.mxu0 0.0
      %274 = vmatprep.subr.mxu0 0.0
      %275 = vmatpush1.msra.mxu0 0.0
      %276 = vmatprep.subr.mxu0 0.0
      %277 = vmatpush1.msra.mxu0 0.0
      %278 = vmatprep.subr.mxu0 0.0
      %279 = vmatpush1.msra.mxu0 0.0
      %280 = vmatprep.subr.mxu0 0.0
      %281 = vmatpush1.msra.mxu0 0.0
      %282 = vmatprep.subr.mxu0 0.0
      %283 = vmatpush1.msra.mxu0 0.0
      %284 = vmatprep.subr.mxu0 0.0
      %285 = vmatpush1.msra.mxu0 0.0
      %286 = vmatprep.subr.mxu0 0.0
      %287 = vmatpush1.msra.mxu0 0.0
      %288 = vmatprep.subr.mxu0 0.0
      %289 = vmatpush1.msra.mxu0 0.0
      %290 = vmatprep.subr.mxu0 0.0
      %291 = vmatpush1.msra.mxu0 0.0
      %292 = vmatprep.subr.mxu0 0.0
      %293 = vmatpush1.msra.mxu0 0.0
      %294 = vmatprep.subr.mxu0 0.0
      %295 = vmatpush1.msra.mxu0 0.0
      %296 = vmatprep.subr.mxu0 0.0
      %297 = vmatpush1.msra.mxu0 0.0
      %298 = vmatprep.subr.mxu0 0.0
      %299 = vmatpush1.msra.mxu0 0.0
      %300 = vmatprep.subr.mxu0 0.0
      %301 = vmatpush1.msra.mxu0 0.0
      %302 = vmatprep.subr.mxu0 0.0
      %303 = vmatpush1.msra.mxu0 0.0
      %304 = vmatprep.subr.mxu0 0.0
      %305 = vmatpush1.msra.mxu0 0.0
      %306 = vmatprep.subr.mxu0 0.0
      %307 = vmatpush1.msra.mxu0 0.0
      %308 = vmatprep.subr.mxu0 0.0
      %309 = vmatpush1.msra.mxu0 0.0
      %310 = vmatprep.subr.mxu0 0.0
      %311 = vmatpush1.msra.mxu0 0.0
      %312 = vmatprep.subr.mxu0 0.0
      %313 = vmatpush1.msra.mxu0 0.0
      %314 = vmatprep.mubr.f32.mxu0 0.0
      %315 = vmatmul.mubr.f32.gmra.mrb[0].mxu0 %v203
      %v316 = vpop.f32.mrb[0].mxu0
      %v317 = vadd.f32 %v199, %v316
      %v318 = vpop.f32.mrb[0].mxu0
      %319 = vmatprep.mubr.f32.mxu0 0.0
      %320 = vmatmul.mubr.f32.gmra.mrb[0].mxu0 %v206
      %v321 = vpop.f32.mrb[0].mxu0
      %v322 = vadd.f32 %v199, %v321
      %v323 = vpop.f32.mrb[0].mxu0
      %324 = vmatprep.mubr.f32.mxu0 0.0
      %325 = vmatmul.mubr.f32.gmra.mrb[0].mxu0 %v209
      %v326 = vpop.f32.mrb[0].mxu0
      %v327 = vadd.f32 %v199, %v326
      %v328 = vpop.f32.mrb[0].mxu0
      %329 = vmatprep.mubr.f32.mxu0 0.0
      %330 = vmatmul.mubr.f32.gmra.mrb[0].mxu0 %v212
      %v331 = vpop.f32.mrb[0].mxu0
      %v332 = vadd.f32 %v199, %v331
      %v333 = vpop.f32.mrb[0].mxu0
      %334 = vmatprep.mubr.f32.mxu0 0.0
      %335 = vmatmul.mubr.f32.gmra.mrb[0].mxu0 %v215
      %v336 = vpop.f32.mrb[0].mxu0
      %v337 = vadd.f32 %v199, %v336
      %v338 = vpop.f32.mrb[0].mxu0
      %339 = vmatprep.mubr.f32.mxu0 0.0
      %340 = vmatmul.mubr.f32.gmra.mrb[0].mxu0 %v218
      %v341 = vpop.f32.mrb[0].mxu0
      %v342 = vadd.f32 %v199, %v341
      %v343 = vpop.f32.mrb[0].mxu0
      %344 = vmatprep.mubr.f32.mxu0 0.0
      %345 = vmatmul.mubr.f32.gmra.mrb[0].mxu0 %v221
      %v346 = vpop.f32.mrb[0].mxu0
      %v347 = vadd.f32 %v199, %v346
      %v348 = vpop.f32.mrb[0].mxu0
      %349 = vmatprep.mubr.f32.mxu0 0.0
      %350 = vmatmul.mubr.f32.gmra.mrb[0].mxu0 %v224
      %v351 = vpop.f32.mrb[0].mxu0
      %v352 = vadd.f32 %v199, %v351
      %v353 = vpop.f32.mrb[0].mxu0
      %354 = vmatprep.mubr.f32.mxu0 0.0
      %355 = vmatmul.mubr.f32.gmra.mrb[0].mxu0 %v227
      %v356 = vpop.f32.mrb[0].mxu0
      %v357 = vadd.f32 %v199, %v356
      %v358 = vpop.f32.mrb[0].mxu0
      %359 = vmatprep.mubr.f32.mxu0 0.0
      %360 = vmatmul.mubr.f32.gmra.mrb[0].mxu0 %v230
      %v361 = vpop.f32.mrb[0].mxu0
      %v362 = vadd.f32 %v199, %v361
      %v363 = vpop.f32.mrb[0].mxu0
      %364 = vmatprep.mubr.f32.mxu0 0.0
      %365 = vmatmul.mubr.f32.gmra.mrb[0].mxu0 %v233
      %v366 = vpop.f32.mrb[0].mxu0
      %v367 = vadd.f32 %v199, %v366
      %v368 = vpop.f32.mrb[0].mxu0
      %369 = vmatprep.mubr.f32.mxu0 0.0
      %370 = vmatmul.mubr.f32.gmra.mrb[0].mxu0 %v236
      %v371 = vpop.f32.mrb[0].mxu0
      %v372 = vadd.f32 %v199, %v371
      %v373 = vpop.f32.mrb[0].mxu0
      %374 = vmatprep.mubr.f32.mxu0 0.0
      %375 = vmatmul.mubr.f32.gmra.mrb[0].mxu0 %v239
      %v376 = vpop.f32.mrb[0].mxu0
      %v377 = vadd.f32 %v199, %v376
      %v378 = vpop.f32.mrb[0].mxu0
      %379 = vmatprep.mubr.f32.mxu0 0.0
      %380 = vmatmul.mubr.f32.gmra.mrb[0].mxu0 %v242
      %v381 = vpop.f32.mrb[0].mxu0
      %v382 = vadd.f32 %v199, %v381
      %v383 = vpop.f32.mrb[0].mxu0
      %384 = vmatprep.mubr.f32.mxu0 0.0
      %385 = vmatmul.mubr.f32.gmra.mrb[0].mxu0 %v245
      %v386 = vpop.f32.mrb[0].mxu0
      %v387 = vadd.f32 %v199, %v386
      %v388 = vpop.f32.mrb[0].mxu0
      %389 = vmatprep.mubr.f32.mxu0 0.0
      %390 = vmatmul.mubr.f32.gmra.mrb[0].mxu0 %v248
      %v391 = vpop.f32.mrb[0].mxu0
      %v392 = vadd.f32 %v199, %v391
      %v393 = vpop.f32.mrb[0].mxu0
      %394 = vdwg.mxu0
      %vm395 = vcmask 130048
      %396 = vst.msk [vmem:[%s172] sm:$0xff] %vm395, %v317
      %397 = vst.msk [vmem:[%s172 + $0x8] sm:$0xff] %vm395, %v322
      %398 = vst.msk [vmem:[%s172 + $0x10] sm:$0xff] %vm395, %v327
      %399 = vst.msk [vmem:[%s172 + $0x18] sm:$0xff] %vm395, %v332
      %400 = vst.msk [vmem:[%s172 + $0x20] sm:$0xff] %vm395, %v337
      %401 = vst.msk [vmem:[%s172 + $0x28] sm:$0xff] %vm395, %v342
      %402 = vst.msk [vmem:[%s172 + $0x30] sm:$0xff] %vm395, %v347
      %403 = vst.msk [vmem:[%s172 + $0x38] sm:$0xff] %vm395, %v352
      %404 = vst.msk [vmem:[%s172 + $0x40] sm:$0xff] %vm395, %v357
      %405 = vst.msk [vmem:[%s172 + $0x48] sm:$0xff] %vm395, %v362
      %406 = vst.msk [vmem:[%s172 + $0x50] sm:$0xff] %vm395, %v367
      %407 = vst.msk [vmem:[%s172 + $0x58] sm:$0xff] %vm395, %v372
      %408 = vst.msk [vmem:[%s172 + $0x60] sm:$0xff] %vm395, %v377
      %409 = vst.msk [vmem:[%s172 + $0x68] sm:$0xff] %vm395, %v382
      %410 = vst.msk [vmem:[%s172 + $0x70] sm:$0xff] %vm395, %v387
      %411 = vst.msk [vmem:[%s172 + $0x78] sm:$0xff] %vm395, %v392
      %s412 = smul.u32 16, %s14
      %p413 = scmp.lt.s32.totalorder %s412, 31
      %s414 = scalar_select %p413, %s412, 31
      %s415 = smul.addr %s414, 8
      %s416 = scalar_lea.vmem %s3, %s415
      // Predicated region
      $region33: #{tpu_custom_call.1} parent=31 // pred_check
        %p417 = pneg %p100
      $region34: #{tpu_custom_call.1} parent=31 // pred_check_branch
        %419 = sbr.rel (%p417) target = $region36
      $region35: #{tpu_custom_call.1} parent=31 // pred_region
        %s420 = smul.u32 16, %s14
      $region36: #{tpu_custom_call.1} parent=31 // pred_fallthru
        _
    $region32: #{tpu_custom_call.1} parent=5 // pred_fallthru
      _
    %p421 = scmp.le.s32.totalorder 2, %s9
    // Predicated region
    $region37: #{tpu_custom_call.1} parent=5 // pred_check
      %p422 = pneg %p421
    $region38: #{tpu_custom_call.1} parent=5 // pred_check_branch
      %424 = sbr.rel (%p422) target = $region40
    $region39: #{tpu_custom_call.1} parent=5 // pred_region
      %s425 = ssub.s32 %s9, 2
      // Predicated region
      $region41: #{tpu_custom_call.1} parent=39 // pred_check
        %p426 = pneg %p106
      $region42: #{tpu_custom_call.1} parent=39 // pred_check_branch
        %428 = sbr.rel (%p426) target = $region44
      $region43: #{tpu_custom_call.1} parent=39 // pred_region
        %s429 = smul.u32 16, %s15
        %p430 = scmp.lt.s32.totalorder %s429, 31
        %s431 = scalar_select %p430, %s429, 31
        %s432 = smul.addr %s431, 8
        %s433 = scalar_lea.vmem %s3, %s432
      $region44: #{tpu_custom_call.1} parent=39 // pred_fallthru
        _
    $region40: #{tpu_custom_call.1} parent=5 // pred_fallthru
      _
  $region6: #{tpu_custom_call.1} parent=0 // loop_footer
    %s13 = sadd.s32 1, %s9
  $region7: #{tpu_custom_call.1} parent=0 // loop_footer_branch
    %8 = sbr.rel target = $region3
  $region8: #{tpu_custom_call.1} parent=0 // loop_exit
    _

</llo_original>
